<compile_context>
chip_gen: v5e
topology: v5e:2x2
jax: 0.10.0
libtpu: 0.0.40
codegen_flags: <defaults>
</compile_context>

<pallas_src>
import functools

import jax
import jax.numpy as jnp
from jax import lax
from jax.experimental import pallas as pl
from jax.experimental.pallas import tpu as pltpu


def _round_up(x, m):
    return -(-x // m) * m


def _vmem_capacity_bytes():
    try:
        return int(pltpu.get_tpu_info().vmem_capacity_bytes)
    except Exception:
        return 64 * 1024 * 1024  # conservative: v7x has 64 MiB per TensorCore


def _plan_tiles(l_out, a_w, s, cinp, coutp, d, cap):
    """Pick the largest lane tile that fits the VMEM budget; return the tiling plan."""
    budget = int(0.85 * cap)
    halo_pad = _round_up(2 * a_w + 2, 128)          # max static tap offset, lane-rounded
    l_out_r = _round_up(l_out, 128)
    cand = {128, 256, 512, 1024, 2048, min(l_out_r, 2048)}
    candidates = sorted((c for c in cand if c <= max(l_out_r, 128)), reverse=True)
    plan = None
    for lt in candidates:
        n_t = -(-l_out // lt)
        l_total = n_t * lt
        l_win = lt + halo_pad                       # per-phase window loaded per tile
        a_hp = -(-(l_total + halo_pad) // a_w)      # phase-plane rows incl. halo + pad
        l_z = a_hp * a_w                            # phase-plane lane extent
        need = (
            2 * (s * s * cinp * l_z * 2)            # double-buffered bf16 phase planes
            + 2 * (coutp * d * 2)                   # double-buffered bf16 stacked weights
            + 2 * (coutp * 4)                       # double-buffered f32 bias
            + 2 * (coutp * lt * 4)                  # double-buffered f32 output tile
            + d * lt * 2                            # bf16 tap-stacking scratch
            + cinp * l_win * 2                      # live per-phase window value
        )
        plan = dict(ltile=lt, n_tiles=n_t, l_total=l_total, l_win=l_win,
                    l_z=l_z, a_hp=a_hp, need=need, budget=budget)
        if need <= budget:
            return plan
    return plan


def _conv_stacked_kernel(z_ref, w_ref, b_ref, o_ref, stk_ref, *,
                         scale, ksize, a_w, cinp, ltile, lwin):
    """One (image, lane-tile) of the strided conv per grid step.

    z_ref   : (1, s, s, CinP, L_z)  bf16  phase planes, spatially flattened
    w_ref   : (CoutP, K*K*CinP)     bf16  tap-stacked weights
    b_ref   : (CoutP, 1)            f32   bias
    o_ref   : (1, CoutP, Ltile)     f32   lane tile of the output
    stk_ref : (K*K*CinP, Ltile)     bf16  stacked tap operand (VMEM scratch)
    """
    t = pl.program_id(1)
    base = pl.multiple_of(t * ltile, ltile)          # 128-aligned dynamic lane offset
    for ph in range(scale):
        n_qh = (ksize - 1 - ph) // scale + 1
        for pw in range(scale):
            n_qw = (ksize - 1 - pw) // scale + 1
            # One aligned dynamic load per phase plane; every tap of this phase is a
            # static (possibly unaligned -> XLU rotate) slice of the loaded window.
            win = z_ref[0, ph, pw, :, pl.ds(base, lwin)]          # (CinP, Lwin) bf16
            for qh in range(n_qh):
                kh = qh * scale + ph
                for qw in range(n_qw):
                    kw = qw * scale + pw
                    kidx = kh * ksize + kw
                    start = qh * a_w + qw                          # static tap offset
                    stk_ref[pl.ds(kidx * cinp, cinp), :] = win[:, start:start + ltile]
    # Single deep MXU contraction; f32 accumulation; bias added once in f32.
    acc = jnp.dot(w_ref[...], stk_ref[...], preferred_element_type=jnp.float32)
    o_ref[0] = (acc + b_ref[...]).astype(o_ref.dtype)


@functools.partial(jax.jit, static_argnames=("scale",))
def down_sample(x_nchw, weight_oihw, bias, *, scale):
    """Forward of downSample: Conv2d(C, C, k=2*scale+1, stride=scale, pad=scale) + bias."""
    N, C, H, W = x_nchw.shape
    Cout = weight_oihw.shape[0]
    s = int(scale)
    K = 2 * s + 1
    Ho = (H + 2 * s - K) // s + 1
    Wo = (W + 2 * s - K) // s + 1
    A_w = Wo + 2                                     # phase-plane width incl. conv halo

    CinP = _round_up(C, 8)
    CoutP = _round_up(Cout, 8)
    D = K * K * CinP                                 # tap-stacked contraction depth
    L_out = Ho * A_w                                 # useful flattened output lanes

    cap = _vmem_capacity_bytes()
    plan = _plan_tiles(L_out, A_w, s, CinP, CoutP, D, cap)
    if plan["need"] > plan["budget"]:
        # TODO(synk): halo-aware row tiling (manual double-buffer DMA) for huge images.
        raise ValueError(
            f"downSample kernel needs ~{plan['need'] / 2**20:.1f} MiB VMEM per step but "
            f"only ~{plan['budget'] / 2**20:.1f} MiB is budgeted on this TPU generation.")
    Ltile, T = plan["ltile"], plan["n_tiles"]
    L_total, L_win, L_z, A_hp = plan["l_total"], plan["l_win"], plan["l_z"], plan["a_hp"]
    vmem_limit = int(min(cap, max(plan["need"] + (8 << 20), 32 << 20)))

    # --- single input-sized pass: bf16 cast + pad (one pad only) + space-to-depth -----
    xb = x_nchw.astype(jnp.bfloat16)
    xp = jnp.pad(xb, ((0, 0), (0, CinP - C),
                      (s, A_hp * s - H - s), (s, A_w * s - W - s)))
    # z[n, ph, pw, c, a, b] = xpad[n, c, a*s + ph, b*s + pw]
    z = xp.reshape(N, CinP, A_hp, s, A_w, s).transpose(0, 3, 5, 1, 2, 4)
    zf = z.reshape(N, s, s, CinP, L_z)

    # --- weights / bias (tiny): stack taps along the contraction dim -------------------
    wp = jnp.pad(weight_oihw.astype(jnp.bfloat16),
                 ((0, CoutP - Cout), (0, CinP - C), (0, 0), (0, 0)))
    w_stk = wp.transpose(0, 2, 3, 1).reshape(CoutP, D)   # [o, (kh*K+kw)*CinP + c]
    b = jnp.pad(bias.astype(jnp.float32), ((0, CoutP - Cout),)).reshape(CoutP, 1)

    kernel = functools.partial(_conv_stacked_kernel, scale=s, ksize=K, a_w=A_w,
                               cinp=CinP, ltile=Ltile, lwin=L_win)

    out_flat = pl.pallas_call(
        kernel,
        out_shape=jax.ShapeDtypeStruct((N, CoutP, L_total), jnp.float32),
        grid_spec=pltpu.PrefetchScalarGridSpec(
            num_scalar_prefetch=0,
            grid=(N, T),
            in_specs=[
                # whole-image phase planes: block index constant across lane tiles, so
                # Pallas only DMAs the image once per n.
                pl.BlockSpec((1, s, s, CinP, L_z), lambda n, t: (n, 0, 0, 0, 0)),
                pl.BlockSpec((CoutP, D), lambda n, t: (0, 0)),
                pl.BlockSpec((CoutP, 1), lambda n, t: (0, 0)),
            ],
            out_specs=pl.BlockSpec((1, CoutP, Ltile), lambda n, t: (n, 0, t)),
            scratch_shapes=[pltpu.VMEM((D, Ltile), jnp.bfloat16)],
        ),
        compiler_params=pltpu.CompilerParams(
            dimension_semantics=("parallel", "parallel"),   # megacore splits N and T
            vmem_limit_bytes=vmem_limit,
        ),
    )(zf, w_stk, b)

    # Rows are stored with stride A_w; drop padded channels, padded lanes, halo columns.
    out = out_flat[:, :Cout, :L_out].reshape(N, Cout, Ho, A_w)[:, :, :, :Wo]
    return out


def _reference_conv(x_nchw, weight_oihw, bias, scale):
    out = lax.conv_general_dilated(
        x_nchw.astype(jnp.float32),
        weight_oihw.astype(jnp.float32),
        window_strides=(scale, scale),
        padding=[(scale, scale), (scale, scale)],
        dimension_numbers=("NCHW", "OIHW", "NCHW"),
        precision=lax.Precision.HIGHEST,
    )
    return out + bias.reshape(1, -1, 1, 1)


if __name__ == "__main__":
    # Small shapes consistent with the module: N=2, C=4, H=W=16, scale=2 -> K=5.
    N, C, H, W = 2, 4, 16, 16
    scale = 2
    K = 2 * scale + 1

    key = jax.random.PRNGKey(0)
    kx, k_w, kb = jax.random.split(key, 3)

    x = jax.random.normal(kx, (N, C, H, W), dtype=jnp.float32)
    fan_in = C * K * K
    bound = 1.0 / (fan_in ** 0.5)
    weight = jax.random.uniform(k_w, (C, C, K, K), jnp.float32, -bound, bound)
    bias = jax.random.uniform(kb, (C,), jnp.float32, -bound, bound)

    out = down_sample(x, weight, bias, scale=scale)
    out = jax.block_until_ready(out)

    # Reference on the same bf16-quantized inputs the kernel feeds to the MXU
    # (accumulation is f32 in both paths), so only summation order differs.
    xq = x.astype(jnp.bfloat16).astype(jnp.float32)
    wq = weight.astype(jnp.bfloat16).astype(jnp.float32)
    ref = _reference_conv(xq, wq, bias, scale)

    assert out.shape == ref.shape, (out.shape, ref.shape)
    assert jnp.allclose(out, ref, atol=2e-3, rtol=2e-3), float(jnp.max(jnp.abs(out - ref)))

    print("KERNEL_OK")
</pallas_src>

<mosaic_0001>
module attributes {stable_mosaic.version = 11 : i64} {
  func.func @_conv_stacked_kernel(%arg0: i32, %arg1: i32, %arg2: memref<1x2x2x8x260xbf16, #tpu.memory_space<vmem>>, %arg3: memref<8x200xbf16, #tpu.memory_space<vmem>>, %arg4: memref<8x1xf32, #tpu.memory_space<vmem>>, %arg5: memref<1x8x128xf32, #tpu.memory_space<vmem>>, %arg6: memref<200x128xbf16, #tpu.memory_space<vmem>>) attributes {dimension_semantics = [#tpu.dimension_semantics<parallel>, #tpu.dimension_semantics<parallel>], iteration_bounds = array<i64: 2, 1>, scalar_prefetch = 0 : i64, scratch_operands = 1 : i64, tpu.core_type = #tpu.core_type<tc>, window_params = [{transform_indices = @transform_0, window_bounds = array<i64: 1, 2, 2, 8, 260>}, {pipeline_mode = #tpu.pipeline_mode<synchronous>, transform_indices = @transform_1, window_bounds = array<i64: 8, 200>}, {pipeline_mode = #tpu.pipeline_mode<synchronous>, transform_indices = @transform_2, window_bounds = array<i64: 8, 1>}, {transform_indices = @transform_3, window_bounds = array<i64: 1, 8, 128>}]} {
    %c128_i32 = arith.constant 128 : i32
    %0 = arith.muli %arg1, %c128_i32 : i32
    %1 = tpu.assume_multiple %0, 128 : i32
    %c0 = arith.constant 0 : index
    %c0_0 = arith.constant 0 : index
    %c0_1 = arith.constant 0 : index
    %c0_2 = arith.constant 0 : index
    %2 = arith.index_cast %1 : i32 to index
    %3 = vector.load %arg2[%c0, %c0_0, %c0_1, %c0_2, %2] : memref<1x2x2x8x260xbf16, #tpu.memory_space<vmem>>, vector<1x1x1x8x256xbf16>
    %4 = vector.shape_cast %3 : vector<1x1x1x8x256xbf16> to vector<8x256xbf16>
    %5 = vector.extract_strided_slice %4 {offsets = [0, 0], sizes = [8, 128], strides = [1, 1]} : vector<8x256xbf16> to vector<8x128xbf16>
    %c0_3 = arith.constant 0 : index
    %c0_4 = arith.constant 0 : index
    %6 = vector.load %arg6[%c0_3, %c0_4] : memref<200x128xbf16, #tpu.memory_space<vmem>>, vector<8x128xbf16>
    tpu.vector_store %arg6[%c0_3, %c0_4], %5 {strides = array<i32>} : memref<200x128xbf16, #tpu.memory_space<vmem>>, vector<8x128xbf16>,
    %7 = vector.extract_strided_slice %4 {offsets = [0, 1], sizes = [8, 128], strides = [1, 1]} : vector<8x256xbf16> to vector<8x128xbf16>
    %c16 = arith.constant 16 : index
    %c0_5 = arith.constant 0 : index
    %8 = vector.load %arg6[%c16, %c0_5] : memref<200x128xbf16, #tpu.memory_space<vmem>>, vector<8x128xbf16>
    tpu.vector_store %arg6[%c16, %c0_5], %7 {strides = array<i32>} : memref<200x128xbf16, #tpu.memory_space<vmem>>, vector<8x128xbf16>,
    %9 = vector.extract_strided_slice %4 {offsets = [0, 2], sizes = [8, 128], strides = [1, 1]} : vector<8x256xbf16> to vector<8x128xbf16>
    %c32 = arith.constant 32 : index
    %c0_6 = arith.constant 0 : index
    %10 = vector.load %arg6[%c32, %c0_6] : memref<200x128xbf16, #tpu.memory_space<vmem>>, vector<8x128xbf16>
    tpu.vector_store %arg6[%c32, %c0_6], %9 {strides = array<i32>} : memref<200x128xbf16, #tpu.memory_space<vmem>>, vector<8x128xbf16>,
    %11 = vector.extract_strided_slice %4 {offsets = [0, 10], sizes = [8, 128], strides = [1, 1]} : vector<8x256xbf16> to vector<8x128xbf16>
    %c80 = arith.constant 80 : index
    %c0_7 = arith.constant 0 : index
    %12 = vector.load %arg6[%c80, %c0_7] : memref<200x128xbf16, #tpu.memory_space<vmem>>, vector<8x128xbf16>
    tpu.vector_store %arg6[%c80, %c0_7], %11 {strides = array<i32>} : memref<200x128xbf16, #tpu.memory_space<vmem>>, vector<8x128xbf16>,
    %13 = vector.extract_strided_slice %4 {offsets = [0, 11], sizes = [8, 128], strides = [1, 1]} : vector<8x256xbf16> to vector<8x128xbf16>
    %c96 = arith.constant 96 : index
    %c0_8 = arith.constant 0 : index
    %14 = vector.load %arg6[%c96, %c0_8] : memref<200x128xbf16, #tpu.memory_space<vmem>>, vector<8x128xbf16>
    tpu.vector_store %arg6[%c96, %c0_8], %13 {strides = array<i32>} : memref<200x128xbf16, #tpu.memory_space<vmem>>, vector<8x128xbf16>,
    %15 = vector.extract_strided_slice %4 {offsets = [0, 12], sizes = [8, 128], strides = [1, 1]} : vector<8x256xbf16> to vector<8x128xbf16>
    %c112 = arith.constant 112 : index
    %c0_9 = arith.constant 0 : index
    %16 = vector.load %arg6[%c112, %c0_9] : memref<200x128xbf16, #tpu.memory_space<vmem>>, vector<8x128xbf16>
    tpu.vector_store %arg6[%c112, %c0_9], %15 {strides = array<i32>} : memref<200x128xbf16, #tpu.memory_space<vmem>>, vector<8x128xbf16>,
    %17 = vector.extract_strided_slice %4 {offsets = [0, 20], sizes = [8, 128], strides = [1, 1]} : vector<8x256xbf16> to vector<8x128xbf16>
    %c160 = arith.constant 160 : index
    %c0_10 = arith.constant 0 : index
    %18 = vector.load %arg6[%c160, %c0_10] : memref<200x128xbf16, #tpu.memory_space<vmem>>, vector<8x128xbf16>
    tpu.vector_store %arg6[%c160, %c0_10], %17 {strides = array<i32>} : memref<200x128xbf16, #tpu.memory_space<vmem>>, vector<8x128xbf16>,
    %19 = vector.extract_strided_slice %4 {offsets = [0, 21], sizes = [8, 128], strides = [1, 1]} : vector<8x256xbf16> to vector<8x128xbf16>
    %c176 = arith.constant 176 : index
    %c0_11 = arith.constant 0 : index
    %20 = vector.load %arg6[%c176, %c0_11] : memref<200x128xbf16, #tpu.memory_space<vmem>>, vector<8x128xbf16>
    tpu.vector_store %arg6[%c176, %c0_11], %19 {strides = array<i32>} : memref<200x128xbf16, #tpu.memory_space<vmem>>, vector<8x128xbf16>,
    %21 = vector.extract_strided_slice %4 {offsets = [0, 22], sizes = [8, 128], strides = [1, 1]} : vector<8x256xbf16> to vector<8x128xbf16>
    %c192 = arith.constant 192 : index
    %c0_12 = arith.constant 0 : index
    %22 = vector.load %arg6[%c192, %c0_12] : memref<200x128xbf16, #tpu.memory_space<vmem>>, vector<8x128xbf16>
    tpu.vector_store %arg6[%c192, %c0_12], %21 {strides = array<i32>} : memref<200x128xbf16, #tpu.memory_space<vmem>>, vector<8x128xbf16>,
    %c0_13 = arith.constant 0 : index
    %c0_14 = arith.constant 0 : index
    %c1 = arith.constant 1 : index
    %c0_15 = arith.constant 0 : index
    %23 = arith.index_cast %1 : i32 to index
    %24 = vector.load %arg2[%c0_13, %c0_14, %c1, %c0_15, %23] : memref<1x2x2x8x260xbf16, #tpu.memory_space<vmem>>, vector<1x1x1x8x256xbf16>
    %25 = vector.shape_cast %24 : vector<1x1x1x8x256xbf16> to vector<8x256xbf16>
    %26 = vector.extract_strided_slice %25 {offsets = [0, 0], sizes = [8, 128], strides = [1, 1]} : vector<8x256xbf16> to vector<8x128xbf16>
    %c8 = arith.constant 8 : index
    %c0_16 = arith.constant 0 : index
    %27 = vector.load %arg6[%c8, %c0_16] : memref<200x128xbf16, #tpu.memory_space<vmem>>, vector<8x128xbf16>
    tpu.vector_store %arg6[%c8, %c0_16], %26 {strides = array<i32>} : memref<200x128xbf16, #tpu.memory_space<vmem>>, vector<8x128xbf16>,
    %28 = vector.extract_strided_slice %25 {offsets = [0, 1], sizes = [8, 128], strides = [1, 1]} : vector<8x256xbf16> to vector<8x128xbf16>
    %c24 = arith.constant 24 : index
    %c0_17 = arith.constant 0 : index
    %29 = vector.load %arg6[%c24, %c0_17] : memref<200x128xbf16, #tpu.memory_space<vmem>>, vector<8x128xbf16>
    tpu.vector_store %arg6[%c24, %c0_17], %28 {strides = array<i32>} : memref<200x128xbf16, #tpu.memory_space<vmem>>, vector<8x128xbf16>,
    %30 = vector.extract_strided_slice %25 {offsets = [0, 10], sizes = [8, 128], strides = [1, 1]} : vector<8x256xbf16> to vector<8x128xbf16>
    %c88 = arith.constant 88 : index
    %c0_18 = arith.constant 0 : index
    %31 = vector.load %arg6[%c88, %c0_18] : memref<200x128xbf16, #tpu.memory_space<vmem>>, vector<8x128xbf16>
    tpu.vector_store %arg6[%c88, %c0_18], %30 {strides = array<i32>} : memref<200x128xbf16, #tpu.memory_space<vmem>>, vector<8x128xbf16>,
    %32 = vector.extract_strided_slice %25 {offsets = [0, 11], sizes = [8, 128], strides = [1, 1]} : vector<8x256xbf16> to vector<8x128xbf16>
    %c104 = arith.constant 104 : index
    %c0_19 = arith.constant 0 : index
    %33 = vector.load %arg6[%c104, %c0_19] : memref<200x128xbf16, #tpu.memory_space<vmem>>, vector<8x128xbf16>
    tpu.vector_store %arg6[%c104, %c0_19], %32 {strides = array<i32>} : memref<200x128xbf16, #tpu.memory_space<vmem>>, vector<8x128xbf16>,
    %34 = vector.extract_strided_slice %25 {offsets = [0, 20], sizes = [8, 128], strides = [1, 1]} : vector<8x256xbf16> to vector<8x128xbf16>
    %c168 = arith.constant 168 : index
    %c0_20 = arith.constant 0 : index
    %35 = vector.load %arg6[%c168, %c0_20] : memref<200x128xbf16, #tpu.memory_space<vmem>>, vector<8x128xbf16>
    tpu.vector_store %arg6[%c168, %c0_20], %34 {strides = array<i32>} : memref<200x128xbf16, #tpu.memory_space<vmem>>, vector<8x128xbf16>,
    %36 = vector.extract_strided_slice %25 {offsets = [0, 21], sizes = [8, 128], strides = [1, 1]} : vector<8x256xbf16> to vector<8x128xbf16>
    %c184 = arith.constant 184 : index
    %c0_21 = arith.constant 0 : index
    %37 = vector.load %arg6[%c184, %c0_21] : memref<200x128xbf16, #tpu.memory_space<vmem>>, vector<8x128xbf16>
    tpu.vector_store %arg6[%c184, %c0_21], %36 {strides = array<i32>} : memref<200x128xbf16, #tpu.memory_space<vmem>>, vector<8x128xbf16>,
    %c0_22 = arith.constant 0 : index
    %c1_23 = arith.constant 1 : index
    %c0_24 = arith.constant 0 : index
    %c0_25 = arith.constant 0 : index
    %38 = arith.index_cast %1 : i32 to index
    %39 = vector.load %arg2[%c0_22, %c1_23, %c0_24, %c0_25, %38] : memref<1x2x2x8x260xbf16, #tpu.memory_space<vmem>>, vector<1x1x1x8x256xbf16>
    %40 = vector.shape_cast %39 : vector<1x1x1x8x256xbf16> to vector<8x256xbf16>
    %41 = vector.extract_strided_slice %40 {offsets = [0, 0], sizes = [8, 128], strides = [1, 1]} : vector<8x256xbf16> to vector<8x128xbf16>
    %c40 = arith.constant 40 : index
    %c0_26 = arith.constant 0 : index
    %42 = vector.load %arg6[%c40, %c0_26] : memref<200x128xbf16, #tpu.memory_space<vmem>>, vector<8x128xbf16>
    tpu.vector_store %arg6[%c40, %c0_26], %41 {strides = array<i32>} : memref<200x128xbf16, #tpu.memory_space<vmem>>, vector<8x128xbf16>,
    %43 = vector.extract_strided_slice %40 {offsets = [0, 1], sizes = [8, 128], strides = [1, 1]} : vector<8x256xbf16> to vector<8x128xbf16>
    %c56 = arith.constant 56 : index
    %c0_27 = arith.constant 0 : index
    %44 = vector.load %arg6[%c56, %c0_27] : memref<200x128xbf16, #tpu.memory_space<vmem>>, vector<8x128xbf16>
    tpu.vector_store %arg6[%c56, %c0_27], %43 {strides = array<i32>} : memref<200x128xbf16, #tpu.memory_space<vmem>>, vector<8x128xbf16>,
    %45 = vector.extract_strided_slice %40 {offsets = [0, 2], sizes = [8, 128], strides = [1, 1]} : vector<8x256xbf16> to vector<8x128xbf16>
    %c72 = arith.constant 72 : index
    %c0_28 = arith.constant 0 : index
    %46 = vector.load %arg6[%c72, %c0_28] : memref<200x128xbf16, #tpu.memory_space<vmem>>, vector<8x128xbf16>
    tpu.vector_store %arg6[%c72, %c0_28], %45 {strides = array<i32>} : memref<200x128xbf16, #tpu.memory_space<vmem>>, vector<8x128xbf16>,
    %47 = vector.extract_strided_slice %40 {offsets = [0, 10], sizes = [8, 128], strides = [1, 1]} : vector<8x256xbf16> to vector<8x128xbf16>
    %c120 = arith.constant 120 : index
    %c0_29 = arith.constant 0 : index
    %48 = vector.load %arg6[%c120, %c0_29] : memref<200x128xbf16, #tpu.memory_space<vmem>>, vector<8x128xbf16>
    tpu.vector_store %arg6[%c120, %c0_29], %47 {strides = array<i32>} : memref<200x128xbf16, #tpu.memory_space<vmem>>, vector<8x128xbf16>,
    %49 = vector.extract_strided_slice %40 {offsets = [0, 11], sizes = [8, 128], strides = [1, 1]} : vector<8x256xbf16> to vector<8x128xbf16>
    %c136 = arith.constant 136 : index
    %c0_30 = arith.constant 0 : index
    %50 = vector.load %arg6[%c136, %c0_30] : memref<200x128xbf16, #tpu.memory_space<vmem>>, vector<8x128xbf16>
    tpu.vector_store %arg6[%c136, %c0_30], %49 {strides = array<i32>} : memref<200x128xbf16, #tpu.memory_space<vmem>>, vector<8x128xbf16>,
    %51 = vector.extract_strided_slice %40 {offsets = [0, 12], sizes = [8, 128], strides = [1, 1]} : vector<8x256xbf16> to vector<8x128xbf16>
    %c152 = arith.constant 152 : index
    %c0_31 = arith.constant 0 : index
    %52 = vector.load %arg6[%c152, %c0_31] : memref<200x128xbf16, #tpu.memory_space<vmem>>, vector<8x128xbf16>
    tpu.vector_store %arg6[%c152, %c0_31], %51 {strides = array<i32>} : memref<200x128xbf16, #tpu.memory_space<vmem>>, vector<8x128xbf16>,
    %c0_32 = arith.constant 0 : index
    %c1_33 = arith.constant 1 : index
    %c1_34 = arith.constant 1 : index
    %c0_35 = arith.constant 0 : index
    %53 = arith.index_cast %1 : i32 to index
    %54 = vector.load %arg2[%c0_32, %c1_33, %c1_34, %c0_35, %53] : memref<1x2x2x8x260xbf16, #tpu.memory_space<vmem>>, vector<1x1x1x8x256xbf16>
    %55 = vector.shape_cast %54 : vector<1x1x1x8x256xbf16> to vector<8x256xbf16>
    %56 = vector.extract_strided_slice %55 {offsets = [0, 0], sizes = [8, 128], strides = [1, 1]} : vector<8x256xbf16> to vector<8x128xbf16>
    %c48 = arith.constant 48 : index
    %c0_36 = arith.constant 0 : index
    %57 = vector.load %arg6[%c48, %c0_36] : memref<200x128xbf16, #tpu.memory_space<vmem>>, vector<8x128xbf16>
    tpu.vector_store %arg6[%c48, %c0_36], %56 {strides = array<i32>} : memref<200x128xbf16, #tpu.memory_space<vmem>>, vector<8x128xbf16>,
    %58 = vector.extract_strided_slice %55 {offsets = [0, 1], sizes = [8, 128], strides = [1, 1]} : vector<8x256xbf16> to vector<8x128xbf16>
    %c64 = arith.constant 64 : index
    %c0_37 = arith.constant 0 : index
    %59 = vector.load %arg6[%c64, %c0_37] : memref<200x128xbf16, #tpu.memory_space<vmem>>, vector<8x128xbf16>
    tpu.vector_store %arg6[%c64, %c0_37], %58 {strides = array<i32>} : memref<200x128xbf16, #tpu.memory_space<vmem>>, vector<8x128xbf16>,
    %60 = vector.extract_strided_slice %55 {offsets = [0, 10], sizes = [8, 128], strides = [1, 1]} : vector<8x256xbf16> to vector<8x128xbf16>
    %c128 = arith.constant 128 : index
    %c0_38 = arith.constant 0 : index
    %61 = vector.load %arg6[%c128, %c0_38] : memref<200x128xbf16, #tpu.memory_space<vmem>>, vector<8x128xbf16>
    tpu.vector_store %arg6[%c128, %c0_38], %60 {strides = array<i32>} : memref<200x128xbf16, #tpu.memory_space<vmem>>, vector<8x128xbf16>,
    %62 = vector.extract_strided_slice %55 {offsets = [0, 11], sizes = [8, 128], strides = [1, 1]} : vector<8x256xbf16> to vector<8x128xbf16>
    %c144 = arith.constant 144 : index
    %c0_39 = arith.constant 0 : index
    %63 = vector.load %arg6[%c144, %c0_39] : memref<200x128xbf16, #tpu.memory_space<vmem>>, vector<8x128xbf16>
    tpu.vector_store %arg6[%c144, %c0_39], %62 {strides = array<i32>} : memref<200x128xbf16, #tpu.memory_space<vmem>>, vector<8x128xbf16>,
    %c0_40 = arith.constant 0 : index
    %c0_41 = arith.constant 0 : index
    %64 = vector.load %arg3[%c0_40, %c0_41] : memref<8x200xbf16, #tpu.memory_space<vmem>>, vector<8x200xbf16>
    %c0_42 = arith.constant 0 : index
    %c0_43 = arith.constant 0 : index
    %65 = vector.load %arg6[%c0_42, %c0_43] : memref<200x128xbf16, #tpu.memory_space<vmem>>, vector<200x128xbf16>
    %cst = arith.constant dense<0.000000e+00> : vector<8x128xf32>
    %66 = tpu.matmul %64, %65, %cst {dimension_numbers = #tpu.dot_dimension_numbers<[1], [0], [0], [1], [0, 0, 1, 1], [], []>} : vector<8x200xbf16>, vector<200x128xbf16>, vector<8x128xf32> -> vector<8x128xf32>
    %c0_44 = arith.constant 0 : index
    %c0_45 = arith.constant 0 : index
    %67 = vector.load %arg4[%c0_44, %c0_45] : memref<8x1xf32, #tpu.memory_space<vmem>>, vector<8x1xf32>
    %68 = vector.broadcast %67 : vector<8x1xf32> to vector<8x128xf32>
    %69 = arith.addf %66, %68 : vector<8x128xf32>
    %c0_46 = arith.constant 0 : index
    %c0_47 = arith.constant 0 : index
    %c0_48 = arith.constant 0 : index
    %70 = vector.load %arg5[%c0_46, %c0_47, %c0_48] : memref<1x8x128xf32, #tpu.memory_space<vmem>>, vector<1x8x128xf32>
    %71 = vector.shape_cast %70 : vector<1x8x128xf32> to vector<8x128xf32>
    %72 = vector.shape_cast %69 : vector<8x128xf32> to vector<1x8x128xf32>
    tpu.vector_store %arg5[%c0_46, %c0_47, %c0_48], %72 {strides = array<i32>} : memref<1x8x128xf32, #tpu.memory_space<vmem>>, vector<1x8x128xf32>,
    return
  }
  func.func @transform_0(%arg0: i32, %arg1: i32) -> (i32, i32, i32, i32, i32) {
    %c0_i32 = arith.constant 0 : i32
    %c0_i32_0 = arith.constant 0 : i32
    %c0_i32_1 = arith.constant 0 : i32
    %c0_i32_2 = arith.constant 0 : i32
    %c0_i32_3 = arith.constant 0 : i32
    return %arg0, %c0_i32, %c0_i32_0, %c0_i32_1, %c0_i32_2 : i32, i32, i32, i32, i32
  }
  func.func @transform_1(%arg0: i32, %arg1: i32) -> (i32, i32) {
    %c0_i32 = arith.constant 0 : i32
    %c0_i32_0 = arith.constant 0 : i32
    %c0_i32_1 = arith.constant 0 : i32
    return %c0_i32, %c0_i32_0 : i32, i32
  }
  func.func @transform_2(%arg0: i32, %arg1: i32) -> (i32, i32) {
    %c0_i32 = arith.constant 0 : i32
    %c0_i32_0 = arith.constant 0 : i32
    %c0_i32_1 = arith.constant 0 : i32
    return %c0_i32, %c0_i32_0 : i32, i32
  }
  func.func @transform_3(%arg0: i32, %arg1: i32) -> (i32, i32, i32) {
    %c0_i32 = arith.constant 0 : i32
    %c0_i32_0 = arith.constant 0 : i32
    return %arg0, %c0_i32, %arg1 : i32, i32, i32
  }
}

</mosaic_0001>

<llo_original>
// kernel: down_sample.1
$region0: #{down_sample.1}
  #allocation0 [shape = 'u32[]', space=smem, size = 0x4, offset = 0x4, fixed_abs, tag = 'smem constant byte address 0x4 - core index']
  #allocation1 [shape = 'u32[72,128]{1,0:T(1,128)}', space=vmem, size = 0x9000, scoped, tag = 'internal scratch']
  #allocation2 [shape = 'bf16[200,128]{1,0:T(8,128)(2,1)}', space=vmem, size = 0xc800, scoped, tag = 'scratch operand']
  %s0 = inlined_call_operand.vmem [shape: bf16[2,2,2,8,260], index: 0, kind: input, shape index: {}]
  %s1 = inlined_call_operand.vmem [shape: bf16[8,200], index: 1, kind: input, shape index: {}]
  %s2 = inlined_call_operand.vmem [shape: f32[8,1], index: 2, kind: input, shape index: {}]
  %s3 = inlined_call_operand.vmem [shape: f32[2,8,128], index: 3, kind: output, shape index: {}]
  %s4 = sld [smem:[#allocation0]]
  $region45: #{down_sample.1} parent=0
    _
  %s6 = ssub.s32 1, %s4
  %s7 = scalar_select 0, %s6, %s4
  loop: start=0, step=1, limit=4
  $region2: #{down_sample.1} parent=0 // loop_pre_header
    _
  $region3: #{down_sample.1} parent=0 // loop_header
    %s9 = sphi 0, %s13
    %p10 = scmp.ge.s32.totalorder %s9, 4
    %s16 = sphi 0, %s28
    %s17 = sphi 0, %s24
    %s18 = sphi 0, %s16
    %s19 = sphi 0, %s17
    %s20 = sphi 0, %s18
    %s21 = sphi 0, %s19
    %s31 = sphi 0, %s33
    %s34 = sphi 0, %s31
    %s35 = sphi 0, %s34
    %s51 = sphi 0, %s35
    %s55 = sphi 0, %s55
    %s57 = sphi 0, %s55
    %s58 = sphi 0, %s57
    %s72 = sphi 0, %s58
    %s76 = sphi 0, %s76
    %s78 = sphi 0, %s76
    %s79 = sphi 0, %s78
    %s93 = sphi 0, %s79
    %s101 = sphi 0, %s103
    %s104 = sphi 0, %s101
    %s105 = sphi 0, %s104
    %s121 = sphi 0, %s105
  $region4: #{down_sample.1} parent=0 // loop_header_branch
    %12 = sbr.rel (%p10) target = $region8
  $region5: #{down_sample.1} parent=0 // loop_body
    %s14 = ssub.s32 %s9, 1
    %s15 = ssub.s32 %s9, 2
    %s22 = sadd.s32 1, %s17
    %p23 = scmp.ge.s32.totalorder %s22, 1
    %s24 = scalar_select %p23, 0, %s22
    %s25 = sadd.s32 1, %s16
    %s26 = scalar_select %p23, %s25, %s16
    %p27 = scmp.ge.s32.totalorder %s26, 2
    %s28 = scalar_select %p27, 0, %s26
    %s29 = ssub.s32 %s16, %s28
    %p30 = scmp.eq.s32.totalorder %s29, 0
    %s32 = sadd.s32 %s31, 1
    %s33 = scalar_select %p30, %s31, %s32
    %p36 = pneg %p30
    %p37 = scmp.eq.s32.totalorder %s9, 1
    %p38 = por %p36, %p37
    %p39 = scmp.ne.s32.totalorder %s31, %s34
    %p40 = scmp.eq.s32.totalorder %s9, 0
    %p41 = por %p39, %p40
    %p42 = scmp.ne.s32.totalorder %s31, %s34
    %p43 = scmp.eq.s32.totalorder %s14, 1
    %p44 = por %p42, %p43
    %p45 = scmp.ne.s32.totalorder %s34, %s35
    %p46 = scmp.eq.s32.totalorder %s14, 0
    %p47 = por %p45, %p46
    %p48 = scmp.ne.s32.totalorder %s34, %s35
    %p49 = scmp.eq.s32.totalorder %s15, 1
    %p50 = por %p48, %p49
    %p52 = scmp.ne.s32.totalorder %s35, %s51
    %p53 = scmp.eq.s32.totalorder %s15, 0
    %p54 = por %p52, %p53
    %s56 = sadd.s32 %s55, 1
    %p59 = scmp.eq.s32.totalorder %s9, 1
    %p60 = scmp.ne.s32.totalorder %s55, %s57
    %p61 = scmp.eq.s32.totalorder %s9, 0
    %p62 = por %p60, %p61
    %p63 = scmp.ne.s32.totalorder %s55, %s57
    %p64 = scmp.eq.s32.totalorder %s14, 1
    %p65 = por %p63, %p64
    %p66 = scmp.ne.s32.totalorder %s57, %s58
    %p67 = scmp.eq.s32.totalorder %s14, 0
    %p68 = por %p66, %p67
    %p69 = scmp.ne.s32.totalorder %s57, %s58
    %p70 = scmp.eq.s32.totalorder %s15, 1
    %p71 = por %p69, %p70
    %p73 = scmp.ne.s32.totalorder %s58, %s72
    %p74 = scmp.eq.s32.totalorder %s15, 0
    %p75 = por %p73, %p74
    %s77 = sadd.s32 %s76, 1
    %p80 = scmp.eq.s32.totalorder %s9, 1
    %p81 = scmp.ne.s32.totalorder %s76, %s78
    %p82 = scmp.eq.s32.totalorder %s9, 0
    %p83 = por %p81, %p82
    %p84 = scmp.ne.s32.totalorder %s76, %s78
    %p85 = scmp.eq.s32.totalorder %s14, 1
    %p86 = por %p84, %p85
    %p87 = scmp.ne.s32.totalorder %s78, %s79
    %p88 = scmp.eq.s32.totalorder %s14, 0
    %p89 = por %p87, %p88
    %p90 = scmp.ne.s32.totalorder %s78, %s79
    %p91 = scmp.eq.s32.totalorder %s15, 1
    %p92 = por %p90, %p91
    %p94 = scmp.ne.s32.totalorder %s79, %s93
    %p95 = scmp.eq.s32.totalorder %s15, 0
    %p96 = por %p94, %p95
    %s97 = ssub.s32 %s16, %s28
    %s98 = ssub.s32 %s17, %s24
    %s99 = sor.u32 %s97, %s98
    %p100 = scmp.eq.s32.totalorder %s99, 0
    %s102 = sadd.s32 %s101, 1
    %s103 = scalar_select %p100, %s101, %s102
    %p106 = pneg %p100
    %p107 = scmp.eq.s32.totalorder %s9, 1
    %p108 = por %p106, %p107
    %p109 = scmp.ne.s32.totalorder %s101, %s104
    %p110 = scmp.eq.s32.totalorder %s9, 0
    %p111 = por %p109, %p110
    %p112 = scmp.ne.s32.totalorder %s101, %s104
    %p113 = scmp.eq.s32.totalorder %s14, 1
    %p114 = por %p112, %p113
    %p115 = scmp.ne.s32.totalorder %s104, %s105
    %p116 = scmp.eq.s32.totalorder %s14, 0
    %p117 = por %p115, %p116
    %p118 = scmp.ne.s32.totalorder %s104, %s105
    %p119 = scmp.eq.s32.totalorder %s15, 1
    %p120 = por %p118, %p119
    %p122 = scmp.ne.s32.totalorder %s105, %s121
    %p123 = scmp.eq.s32.totalorder %s15, 0
    %p124 = por %p122, %p123
    %p125 = scmp.le.s32.totalorder 1, %s9
    %p126 = scmp.lt.s32.totalorder %s9, 3
    %p127 = pnand %p125, %p126
    %p128 = pneg %p127
    // Predicated region
    $region9: #{down_sample.1} parent=5 // pred_check
      _
    $region10: #{down_sample.1} parent=5 // pred_check_branch
      %130 = sbr.rel (%p127) target = $region12
    $region11: #{down_sample.1} parent=5 // pred_region
      %s131 = ssub.s32 %s9, 1
      // Predicated region
      $region13: #{down_sample.1} parent=11 // pred_check
        %p132 = pneg %p68
      $region14: #{down_sample.1} parent=11 // pred_check_branch
        %134 = sbr.rel (%p132) target = $region16
      $region15: #{down_sample.1} parent=11 // pred_region
        _
      $region16: #{down_sample.1} parent=11 // pred_fallthru
        _
      // Predicated region
      $region17: #{down_sample.1} parent=11 // pred_check
        %p135 = pneg %p89
      $region18: #{down_sample.1} parent=11 // pred_check_branch
        %137 = sbr.rel (%p135) target = $region20
      $region19: #{down_sample.1} parent=11 // pred_region
        _
      $region20: #{down_sample.1} parent=11 // pred_fallthru
        _
    $region12: #{down_sample.1} parent=5 // pred_fallthru
      _
    %p138 = scmp.lt.s32.totalorder %s9, 2
    // Predicated region
    $region21: #{down_sample.1} parent=5 // pred_check
      %p139 = pneg %p138
    $region22: #{down_sample.1} parent=5 // pred_check_branch
      %141 = sbr.rel (%p139) target = $region24
    $region23: #{down_sample.1} parent=5 // pred_region
      // Predicated region
      $region25: #{down_sample.1} parent=23 // pred_check
        %p142 = pneg %p41
      $region26: #{down_sample.1} parent=23 // pred_check_branch
        %144 = sbr.rel (%p142) target = $region28
      $region27: #{down_sample.1} parent=23 // pred_region
        %p145 = scmp.lt.s32.totalorder %s16, 1
        %s146 = scalar_select %p145, %s16, 1
        %s147 = smul.addr %s146, 12
        %s148 = smul.addr %s147, 4
        %s149 = scalar_lea.vmem %s0, %s148
      $region28: #{down_sample.1} parent=23 // pred_fallthru
        _
    $region24: #{down_sample.1} parent=5 // pred_fallthru
      _
    %p150 = scmp.le.s32.totalorder 1, %s9
    %p151 = scmp.lt.s32.totalorder %s9, 3
    %p152 = pnand %p150, %p151
    %p153 = pneg %p152
    // Predicated region
    $region29: #{down_sample.1} parent=5 // pred_check
      _
    $region30: #{down_sample.1} parent=5 // pred_check_branch
      %155 = sbr.rel (%p152) target = $region32
    $region31: #{down_sample.1} parent=5 // pred_region
      %s156 = ssub.s32 %s9, 1
      %p157 = scmp.lt.s32.totalorder %s18, 1
      %s158 = scalar_select %p157, %s18, 1
      %s159 = smul.addr %s158, 12
      %s160 = smul.addr %s159, 4
      %s161 = scalar_lea.vmem %s0, %s160
      %p162 = pneg %p47
      %p163 = pneg %p44
      %p164 = pneg %p68
      %p165 = pneg %p65
      %p166 = pneg %p89
      %p167 = pneg %p86
      %p168 = pneg %p117
      %p169 = pneg %p114
      %p170 = scmp.lt.s32.totalorder %s18, 1
      %s171 = scalar_select %p170, %s18, 1
      %p172 = scmp.lt.s32.totalorder %s19, 0
      %s173 = scalar_select %p172, %s19, 0
      %s174 = sadd.s32 %s173, %s171
      %s175 = smul.addr %s174, 8
      %s176 = scalar_lea.vmem %s3, %s175
      %p177 = scmp.lt.s32.totalorder %s18, 1
      %s178 = scalar_select %p177, %s18, 1
      %s179 = smul.addr %s178, 12
      %s180 = smul.addr %s179, 4
      %s181 = scalar_lea.vmem %s0, %s180
      %p182 = scmp.lt.s32.totalorder %s18, 1
      %s183 = scalar_select %p182, %s18, 1
      %p184 = scmp.lt.s32.totalorder %s19, 0
      %s185 = scalar_select %p184, %s19, 0
      %s186 = sadd.s32 %s185, %s183
      %s187 = smul.addr %s186, 8
      %s188 = scalar_lea.vmem %s3, %s187
      %s190 = smul.u32 %s19, 128
      %s191 = sshra.s32 %s190, 7
      %s192 = sand.u32 %s190, 127
      %s193 = smul.addr %s191, 4
      %s194 = scalar_lea.vmem %s181, %s193
      %v195 = vld [vmem:[%s194] sm:$0xff]
      %196 = vst [vmem:[#allocation2] sm:$0xf] %v195
      %198 = vrot.lane.b32.xlu0 %v195, 127
      %v199 = vpop.permute.xlu0 %198
      %v200 = vrot.slane %v199, 4
      %vm201 = vcmask 1039360
      %v202 = vsel %vm201, %v199, %v200
      %204 = vst [vmem:[#allocation2 + $0x8] sm:$0xf] %v202
      %205 = vrot.lane.b32.xlu0 %v195, 126
      %v206 = vpop.permute.xlu0 %205
      %v207 = vrot.slane %v206, 4
      %vm208 = vcmask 1031168
      %v209 = vsel %vm208, %v206, %v207
      %211 = vst [vmem:[#allocation2 + $0x10] sm:$0xf] %v209
      %212 = vrot.lane.b32.xlu0 %v195, 118
      %v213 = vpop.permute.xlu0 %212
      %v214 = vrot.slane %v213, 4
      %vm215 = vcmask 965632
      %v216 = vsel %vm215, %v213, %v214
      %218 = vst [vmem:[#allocation2 + $0x28] sm:$0xf] %v216
      %219 = vrot.lane.b32.xlu0 %v195, 117
      %v220 = vpop.permute.xlu0 %219
      %v221 = vrot.slane %v220, 4
      %vm222 = vcmask 957440
      %v223 = vsel %vm222, %v220, %v221
      %225 = vst [vmem:[#allocation2 + $0x30] sm:$0xf] %v223
      %226 = vrot.lane.b32.xlu0 %v195, 116
      %v227 = vpop.permute.xlu0 %226
      %v228 = vrot.slane %v227, 4
      %vm229 = vcmask 949248
      %v230 = vsel %vm229, %v227, %v228
      %232 = vst [vmem:[#allocation2 + $0x38] sm:$0xf] %v230
      %233 = vrot.lane.b32.xlu0 %v195, 108
      %v234 = vpop.permute.xlu0 %233
      %v235 = vrot.slane %v234, 4
      %vm236 = vcmask 883712
      %v237 = vsel %vm236, %v234, %v235
      %239 = vst [vmem:[#allocation2 + $0x50] sm:$0xf] %v237
      %240 = vrot.lane.b32.xlu0 %v195, 107
      %v241 = vpop.permute.xlu0 %240
      %v242 = vrot.slane %v241, 4
      %vm243 = vcmask 875520
      %v244 = vsel %vm243, %v241, %v242
      %246 = vst [vmem:[#allocation2 + $0x58] sm:$0xf] %v244
      %247 = vrot.lane.b32.xlu0 %v195, 106
      %v248 = vpop.permute.xlu0 %247
      %v249 = vrot.slane %v248, 4
      %vm250 = vcmask 867328
      %v251 = vsel %vm250, %v248, %v249
      %253 = vst [vmem:[#allocation2 + $0x60] sm:$0xf] %v251
      %s254 = sadd.s32 %s191, 3
      %s255 = smul.addr %s254, 4
      %s256 = scalar_lea.vmem %s181, %s255
      %v257 = vld [vmem:[%s256] sm:$0xff]
      %258 = vst [vmem:[#allocation2 + $0x4] sm:$0xf] %v257
      %260 = vrot.lane.b32.xlu0 %v257, 127
      %v261 = vpop.permute.xlu0 %260
      %v262 = vrot.slane %v261, 4
      %v263 = vsel %vm201, %v261, %v262
      %265 = vst [vmem:[#allocation2 + $0xc] sm:$0xf] %v263
      %266 = vrot.lane.b32.xlu0 %v257, 118
      %v267 = vpop.permute.xlu0 %266
      %v268 = vrot.slane %v267, 4
      %v269 = vsel %vm215, %v267, %v268
      %271 = vst [vmem:[#allocation2 + $0x2c] sm:$0xf] %v269
      %272 = vrot.lane.b32.xlu0 %v257, 117
      %v273 = vpop.permute.xlu0 %272
      %v274 = vrot.slane %v273, 4
      %v275 = vsel %vm222, %v273, %v274
      %277 = vst [vmem:[#allocation2 + $0x34] sm:$0xf] %v275
      %278 = vrot.lane.b32.xlu0 %v257, 108
      %v279 = vpop.permute.xlu0 %278
      %v280 = vrot.slane %v279, 4
      %v281 = vsel %vm236, %v279, %v280
      %283 = vst [vmem:[#allocation2 + $0x54] sm:$0xf] %v281
      %284 = vrot.lane.b32.xlu0 %v257, 107
      %v285 = vpop.permute.xlu0 %284
      %v286 = vrot.slane %v285, 4
      %v287 = vsel %vm243, %v285, %v286
      %289 = vst [vmem:[#allocation2 + $0x5c] sm:$0xf] %v287
      %s290 = sadd.s32 %s191, 6
      %s291 = smul.addr %s290, 4
      %s292 = scalar_lea.vmem %s181, %s291
      %v293 = vld [vmem:[%s292] sm:$0xff]
      %294 = vst [vmem:[#allocation2 + $0x14] sm:$0xf] %v293
      %296 = vrot.lane.b32.xlu0 %v293, 127
      %v297 = vpop.permute.xlu0 %296
      %v298 = vrot.slane %v297, 4
      %v299 = vsel %vm201, %v297, %v298
      %301 = vst [vmem:[#allocation2 + $0x1c] sm:$0xf] %v299
      %302 = vrot.lane.b32.xlu0 %v293, 126
      %v303 = vpop.permute.xlu0 %302
      %v304 = vrot.slane %v303, 4
      %v305 = vsel %vm208, %v303, %v304
      %307 = vst [vmem:[#allocation2 + $0x24] sm:$0xf] %v305
      %308 = vrot.lane.b32.xlu0 %v293, 118
      %v309 = vpop.permute.xlu0 %308
      %v310 = vrot.slane %v309, 4
      %v311 = vsel %vm215, %v309, %v310
      %313 = vst [vmem:[#allocation2 + $0x3c] sm:$0xf] %v311
      %314 = vrot.lane.b32.xlu0 %v293, 117
      %v315 = vpop.permute.xlu0 %314
      %v316 = vrot.slane %v315, 4
      %v317 = vsel %vm222, %v315, %v316
      %319 = vst [vmem:[#allocation2 + $0x44] sm:$0xf] %v317
      %320 = vrot.lane.b32.xlu0 %v293, 116
      %v321 = vpop.permute.xlu0 %320
      %v322 = vrot.slane %v321, 4
      %v323 = vsel %vm229, %v321, %v322
      %325 = vst [vmem:[#allocation2 + $0x4c] sm:$0xf] %v323
      %s326 = sadd.s32 %s254, 6
      %s327 = smul.addr %s326, 4
      %s328 = scalar_lea.vmem %s181, %s327
      %v329 = vld [vmem:[%s328] sm:$0xff]
      %330 = vst [vmem:[#allocation2 + $0x18] sm:$0xf] %v329
      %332 = vrot.lane.b32.xlu0 %v329, 127
      %v333 = vpop.permute.xlu0 %332
      %v334 = vrot.slane %v333, 4
      %v335 = vsel %vm201, %v333, %v334
      %337 = vst [vmem:[#allocation2 + $0x20] sm:$0xf] %v335
      %338 = vrot.lane.b32.xlu0 %v329, 118
      %v339 = vpop.permute.xlu0 %338
      %v340 = vrot.slane %v339, 4
      %v341 = vsel %vm215, %v339, %v340
      %343 = vst [vmem:[#allocation2 + $0x40] sm:$0xf] %v341
      %344 = vrot.lane.b32.xlu0 %v329, 117
      %v345 = vpop.permute.xlu0 %344
      %v346 = vrot.slane %v345, 4
      %v347 = vsel %vm222, %v345, %v346
      %349 = vst [vmem:[#allocation2 + $0x48] sm:$0xf] %v347
      %v350 = vld [vmem:[%s1] sm:$0xff]
      %v351 = vld [vmem:[#allocation2] sm:$0xf]
      %v352 = vld [vmem:[#allocation2 + $0x4] sm:$0xf]
      %v353 = vld [vmem:[#allocation2 + $0x8] sm:$0xf]
      %v354 = vld [vmem:[#allocation2 + $0xc] sm:$0xf]
      %v355 = vld [vmem:[#allocation2 + $0x10] sm:$0xf]
      %v356 = vld [vmem:[#allocation2 + $0x14] sm:$0xf]
      %v357 = vld [vmem:[#allocation2 + $0x18] sm:$0xf]
      %v358 = vld [vmem:[#allocation2 + $0x1c] sm:$0xf]
      %v359 = vld [vmem:[#allocation2 + $0x20] sm:$0xf]
      %v360 = vld [vmem:[#allocation2 + $0x24] sm:$0xf]
      %v361 = vld [vmem:[#allocation2 + $0x28] sm:$0xf]
      %v362 = vld [vmem:[#allocation2 + $0x2c] sm:$0xf]
      %v363 = vld [vmem:[#allocation2 + $0x30] sm:$0xf]
      %v364 = vld [vmem:[#allocation2 + $0x34] sm:$0xf]
      %v365 = vld [vmem:[#allocation2 + $0x38] sm:$0xf]
      %v366 = vld [vmem:[#allocation2 + $0x3c] sm:$0xf]
      %v367 = vld [vmem:[#allocation2 + $0x40] sm:$0xf]
      %v368 = vld [vmem:[#allocation2 + $0x44] sm:$0xf]
      %v369 = vld [vmem:[#allocation2 + $0x48] sm:$0xf]
      %v370 = vld [vmem:[#allocation2 + $0x4c] sm:$0xf]
      %v371 = vld [vmem:[#allocation2 + $0x50] sm:$0xf]
      %v372 = vld [vmem:[#allocation2 + $0x54] sm:$0xf]
      %v373 = vld [vmem:[#allocation2 + $0x58] sm:$0xf]
      %v374 = vld [vmem:[#allocation2 + $0x5c] sm:$0xf]
      %v375 = vld [vmem:[#allocation2 + $0x60] sm:$0xf]
      %v376 = vld [vmem:[%s2] sm:$0xff]
      %378 = vset.pattern.permute.xlu0 0
      %379 = vperm.xlu0 %378, %v376
      %v380 = vpop.permute.xlu0 %379
      %v383 = vunpack.c.l.b16 %v350
      %v384 = vunpack.c.h.b16 %v350
      %v385 = vpack.c.b16 %v383, %v383
      %v386 = vpack.c.b16 %v384, %v384
      %v413 = vunpack.c.l.b16 %v351
      %v414 = vunpack.c.l.b16 %v352
      %v415 = vunpack.c.l.b16 %v353
      %v416 = vunpack.c.l.b16 %v354
      %v417 = vunpack.c.l.b16 %v355
      %v418 = vunpack.c.l.b16 %v356
      %v419 = vunpack.c.l.b16 %v357
      %v420 = vunpack.c.l.b16 %v358
      %v421 = vunpack.c.l.b16 %v359
      %v422 = vunpack.c.l.b16 %v360
      %v423 = vunpack.c.l.b16 %v361
      %v424 = vunpack.c.l.b16 %v362
      %v425 = vunpack.c.l.b16 %v363
      %v426 = vunpack.c.l.b16 %v364
      %v427 = vunpack.c.l.b16 %v365
      %v428 = vunpack.c.l.b16 %v366
      %v429 = vunpack.c.l.b16 %v367
      %v430 = vunpack.c.l.b16 %v368
      %v431 = vunpack.c.l.b16 %v369
      %v432 = vunpack.c.l.b16 %v370
      %v433 = vunpack.c.l.b16 %v371
      %v434 = vunpack.c.l.b16 %v372
      %v435 = vunpack.c.l.b16 %v373
      %v436 = vunpack.c.l.b16 %v374
      %v437 = vunpack.c.l.b16 %v375
      %v438 = vpack.c.b16 %v414, %v413
      %v439 = vpack.c.b16 %v416, %v415
      %v440 = vpack.c.b16 %v418, %v417
      %v441 = vpack.c.b16 %v420, %v419
      %v442 = vpack.c.b16 %v422, %v421
      %v443 = vpack.c.b16 %v424, %v423
      %v444 = vpack.c.b16 %v426, %v425
      %v445 = vpack.c.b16 %v428, %v427
      %v446 = vpack.c.b16 %v430, %v429
      %v447 = vpack.c.b16 %v432, %v431
      %v448 = vpack.c.b16 %v434, %v433
      %v449 = vpack.c.b16 %v436, %v435
      %v450 = vpack.c.b16 %v437, %v437
      %vm463 = vcmask 588800
      %v465 = vsel %vm463, %v386, 0
      %vm467 = vcmask 1043456
      %v469 = vsel %vm467, %v450, 0
      %471 = vmatpush.bf16.msra.mxu0 %v445
      %472 = vmatpush.bf16.msra.mxu0 %v444
      %473 = vmatpush.bf16.msra.mxu0 %v443
      %474 = vmatpush.bf16.msra.mxu0 %v442
      %475 = vmatpush.bf16.msra.mxu0 %v441
      %476 = vmatpush.bf16.msra.mxu0 %v440
      %477 = vmatpush.bf16.msra.mxu0 %v439
      %478 = vmatpush.bf16.msra.mxu0 %v438
      %479 = vmatmul.bf16.gmra.mxu0 %v385
      %v480 = vpop.f32.mrf.mxu0
      %v481 = vadd.f32 %v380, %v480
      %v482 = vpop.f32.mrf.mxu0
      %483 = vdwg.mxu0
      %484 = vmatpush.bf16.msra.mxu0 0
      %485 = vmatpush.bf16.msra.mxu0 0
      %486 = vmatpush.bf16.msra.mxu0 0
      %487 = vmatpush.bf16.msra.mxu0 %v469
      %488 = vmatpush.bf16.msra.mxu0 %v449
      %489 = vmatpush.bf16.msra.mxu0 %v448
      %490 = vmatpush.bf16.msra.mxu0 %v447
      %491 = vmatpush.bf16.msra.mxu0 %v446
      %492 = vmatmul.bf16.gmra.mxu0 %v465
      %v493 = vpop.f32.mrf.mxu0
      %v494 = vadd.f32 %v481, %v493
      %v495 = vpop.f32.mrf.mxu0
      %496 = vdwg.mxu0
      %497 = vst [vmem:[%s188] sm:$0xff] %v494
      %p498 = scmp.lt.s32.totalorder %s18, 1
      %s499 = scalar_select %p498, %s18, 1
      %p500 = scmp.lt.s32.totalorder %s19, 0
      %s501 = scalar_select %p500, %s19, 0
      %s502 = sadd.s32 %s501, %s499
      %s503 = smul.addr %s502, 8
      %s504 = scalar_lea.vmem %s3, %s503
      // Predicated region
      $region33: #{down_sample.1} parent=31 // pred_check
        %p505 = pneg %p114
      $region34: #{down_sample.1} parent=31 // pred_check_branch
        %507 = sbr.rel (%p505) target = $region36
      $region35: #{down_sample.1} parent=31 // pred_region
        _
      $region36: #{down_sample.1} parent=31 // pred_fallthru
        _
    $region32: #{down_sample.1} parent=5 // pred_fallthru
      _
    %p508 = scmp.le.s32.totalorder 2, %s9
    // Predicated region
    $region37: #{down_sample.1} parent=5 // pred_check
      %p509 = pneg %p508
    $region38: #{down_sample.1} parent=5 // pred_check_branch
      %511 = sbr.rel (%p509) target = $region40
    $region39: #{down_sample.1} parent=5 // pred_region
      %s512 = ssub.s32 %s9, 2
      // Predicated region
      $region41: #{down_sample.1} parent=39 // pred_check
        %p513 = pneg %p120
      $region42: #{down_sample.1} parent=39 // pred_check_branch
        %515 = sbr.rel (%p513) target = $region44
      $region43: #{down_sample.1} parent=39 // pred_region
        %p516 = scmp.lt.s32.totalorder %s20, 1
        %s517 = scalar_select %p516, %s20, 1
        %p518 = scmp.lt.s32.totalorder %s21, 0
        %s519 = scalar_select %p518, %s21, 0
        %s520 = sadd.s32 %s519, %s517
        %s521 = smul.addr %s520, 8
        %s522 = scalar_lea.vmem %s3, %s521
      $region44: #{down_sample.1} parent=39 // pred_fallthru
        _
    $region40: #{down_sample.1} parent=5 // pred_fallthru
      _
  $region6: #{down_sample.1} parent=0 // loop_footer
    %s13 = sadd.s32 1, %s9
  $region7: #{down_sample.1} parent=0 // loop_footer_branch
    %8 = sbr.rel target = $region3
  $region8: #{down_sample.1} parent=0 // loop_exit
    _

</llo_original>
